<compile_context>
chip_gen: v5e
topology: v5e:2x2
jax: 0.10.0
libtpu: 0.0.40
codegen_flags: <defaults>
</compile_context>

<pallas_src>
import math

import jax
import jax.numpy as jnp
from jax.experimental import pallas as pl
from jax.experimental.pallas import tpu as pltpu


_SQRT_HALF = 1.0 / math.sqrt(2.0)


def _gelu_exact(x):
    # torch.nn.GELU(approximate='none'): 0.5 * x * (1 + erf(x / sqrt(2)))
    return 0.5 * x * (1.0 + jax.lax.erf(x * _SQRT_HALF))


def _round_up(x, m):
    return (x + m - 1) // m * m


def _tpu_vmem_capacity():
    try:
        info = pltpu.get_tpu_info()
        cap = getattr(info, "vmem_capacity_bytes", None)
        if cap:
            return int(cap)
    except Exception:
        pass
    return 128 << 20  # assume v5e/v6e-sized VMEM if the query is unavailable


def _choose_tiling(n, tile_cap):
    """Return (tile_n, n_pad). tile_n is a multiple of 8; when the grid has more
    than one step it is a multiple of 128 (lane-dense (1, tile_n) score blocks)."""
    n8 = _round_up(max(int(n), 1), 8)
    if n8 < 256 and n8 <= tile_cap:
        return n8, n8                             # single block, no padding waste
    candidates = [t for t in (512, 256, 128) if t <= tile_cap] or [128]
    for t in candidates:                          # largest first: amortize per-step overhead
        n_pad = _round_up(n8, t)
        steps = n_pad // t
        waste_ok = (n_pad - n8) <= max(64, n8 // 8)   # <= ~12.5% padded (dead) rows
        cores_ok = steps >= 2 or n8 < 256             # feed both v7x TensorCores
        if waste_ok and cores_ok:
            return t, n_pad
    t = candidates[-1]
    return t, _round_up(n8, t)


def _estimate_vmem_bytes(tile_n, in_c, layer_widths, h_last,
                         act_bytes, hid_bytes, weight_bytes):
    f32 = 4
    rows = 2 * tile_n
    # Double-buffered pipelined blocks: stacked input, stacked hidden out, score row.
    io = 2 * (rows * in_c * act_bytes + rows * h_last * hid_bytes + tile_n * f32)
    widest = max([in_c, h_last] + list(layer_widths))
    interm = 4 * rows * widest * f32              # matmul results / GELU temporaries
    return io + 2 * weight_bytes + interm         # weights double-buffered by the pipeline


def _make_kernel(num_layers, tile_n, in_c, h_last, mm_dtype, precision):
    """Kernel ref order:
      x_stacked, (W_0, b_0), ..., (W_{L-1}, b_{L-1}), W_bil, score_out, hidden_out
    W_k pre-transposed to [in, out] (mm_dtype); biases [1, out] (f32);
    W_bil [h_last, h_last] (mm_dtype)."""

    def kernel(*refs):
        x_ref = refs[0]
        idx = 1
        # (2, tile_n, C) -> (2*tile_n, C): leading-dim collapse, free in VMEM
        # (tile_n is a multiple of 8, so the sublane tiling is unchanged).
        h = x_ref[...].reshape(2 * tile_n, in_c)
        for _ in range(num_layers):
            w = refs[idx][...]        # [in, out]  (mm_dtype)
            b = refs[idx + 1][...]    # [1, out]   (f32)
            idx += 2
            z = jnp.dot(h.astype(mm_dtype), w,
                        preferred_element_type=jnp.float32,
                        precision=precision) + b
            h = _gelu_exact(z)        # elementwise math in f32 (v5e-friendly)
            # dropout: identity in eval mode
        w_bil = refs[idx][...]        # [h_last, h_last] (mm_dtype)
        idx += 1
        score_ref, hid_ref = refs[idx], refs[idx + 1]

        hi = h[:tile_n]
        hj = h[tile_n:]
        bl = jnp.dot(hi.astype(mm_dtype), w_bil,
                     preferred_element_type=jnp.float32, precision=precision)
        score = jnp.sum(bl * hj, axis=-1)               # [tile_n]
        score_ref[...] = score.reshape(1, tile_n)       # lane-dense row store
        # Single stacked store for both hidden outputs (one DMA stream).
        hid_ref[...] = h.reshape(2, tile_n, h_last).astype(hid_ref.dtype)

    return kernel


def make_mlp_bil_predictor(params, *, mm_dtype=jnp.bfloat16,
                           hidden_dtype=jnp.float32, tile_cap=None):
    """params: dict with 'lin_w' (list of [out, in] torch-layout weights),
    'lin_b' (list of [out] biases), 'bilin_w' ([out, in], no bias).

    Returns a jitted forward(x_i, x_j) -> (score[n], x_i_hidden[n, h], x_j_hidden[n, h]).
      mm_dtype:     dtype fed to the MXU (bf16 recommended on v6e/v7x; float32 runs
                    the MXU at Precision.HIGHEST for exact checking).
      hidden_dtype: dtype of the returned hidden activations (bf16 halves writeback).
    """
    mm_dtype = jnp.dtype(mm_dtype)
    hidden_dtype = jnp.dtype(hidden_dtype)
    exact = mm_dtype == jnp.dtype(jnp.float32)
    precision = jax.lax.Precision.HIGHEST if exact else None
    act_dtype = jnp.dtype(jnp.float32) if exact else mm_dtype

    # One-time weight prep (outside the hot path): transpose to [in, out], cast.
    ws = [jnp.asarray(w).T.astype(mm_dtype) for w in params["lin_w"]]
    bs = [jnp.asarray(b).reshape(1, -1).astype(jnp.float32) for b in params["lin_b"]]
    w_bil = jnp.asarray(params["bilin_w"]).T.astype(mm_dtype)

    num_layers = len(ws)
    in_c = int(ws[0].shape[0])
    h_last = int(w_bil.shape[1])
    layer_widths = [int(w.shape[1]) for w in ws]
    weight_bytes = (sum(int(w.size) * w.dtype.itemsize for w in ws)
                    + sum(int(b.size) * b.dtype.itemsize for b in bs)
                    + int(w_bil.size) * w_bil.dtype.itemsize)

    vmem_cap = _tpu_vmem_capacity()
    budget_cap = (vmem_cap * 3) // 4                     # headroom for compiler scratch/spill
    cap = tile_cap if tile_cap is not None else (512 if vmem_cap >= (100 << 20) else 256)

    flat_weights = []
    for w, b in zip(ws, bs):
        flat_weights.extend([w, b])
    flat_weights.append(w_bil)

    @jax.jit
    def forward(x_i, x_j):
        n, c = x_i.shape
        assert x_j.shape == x_i.shape and c == in_c
        tile_n, n_pad = _choose_tiling(n, cap)

        def est(t):
            return _estimate_vmem_bytes(t, in_c, layer_widths, h_last,
                                        act_dtype.itemsize, hidden_dtype.itemsize,
                                        weight_bytes)

        # Shrink the row tile if the VMEM estimate exceeds the per-chip budget.
        # TODO(synk): if hidden widths grow so resident weights alone exceed the
        # v7x budget, switch to a K/N-tiled weight grid axis with a pl.when
        # accumulator instead of whole-weight residency.
        while tile_n >= 256 and tile_n % 128 == 0 and est(tile_n) > budget_cap:
            tile_n //= 2
            n_pad = _round_up(max(int(n), 1), tile_n)
        vmem_limit = int(min(budget_cap, max(32 << 20, 2 * est(tile_n))))

        # Stack the two activation streams at the DMA level (no in-kernel concat);
        # bf16 on the wire when the MXU path is bf16.
        x = jnp.stack([x_i.astype(act_dtype), x_j.astype(act_dtype)], axis=0)
        if n_pad != n:
            x = jnp.pad(x, ((0, 0), (0, n_pad - n), (0, 0)))

        grid = (n_pad // tile_n,)

        in_specs = [pl.BlockSpec((2, tile_n, in_c), lambda i: (0, i, 0))]
        for w, b in zip(ws, bs):
            in_specs.append(pl.BlockSpec(w.shape, lambda i: (0, 0)))
            in_specs.append(pl.BlockSpec(b.shape, lambda i: (0, 0)))
        in_specs.append(pl.BlockSpec(w_bil.shape, lambda i: (0, 0)))

        out_shape = (
            jax.ShapeDtypeStruct((1, n_pad), jnp.float32),            # score (lane-dense row)
            jax.ShapeDtypeStruct((2, n_pad, h_last), hidden_dtype),   # stacked hi / hj
        )
        out_specs = (
            pl.BlockSpec((1, tile_n), lambda i: (0, i)),
            pl.BlockSpec((2, tile_n, h_last), lambda i: (0, i, 0)),
        )

        score_row, hidden = pl.pallas_call(
            _make_kernel(num_layers, tile_n, in_c, h_last, mm_dtype, precision),
            out_shape=out_shape,
            grid_spec=pltpu.PrefetchScalarGridSpec(
                num_scalar_prefetch=0,
                grid=grid,
                in_specs=in_specs,
                out_specs=out_specs,
            ),
            compiler_params=pltpu.CompilerParams(
                dimension_semantics=("parallel",),
                vmem_limit_bytes=vmem_limit,
            ),
        )(x, *flat_weights)

        return score_row[0, :n], hidden[0, :n], hidden[1, :n]

    return forward


def mlp_bil_predictor(x_i, x_j, params, **kwargs):
    """Convenience one-shot wrapper (builds the jitted forward and calls it)."""
    return make_mlp_bil_predictor(params, **kwargs)(x_i, x_j)


def _init_params(key, in_channels, hidden_channels):
    """Deterministic synthetic init (torch Linear layout: W is [out, in])."""
    params = {"lin_w": [], "lin_b": [], "bilin_w": None}
    dims = [in_channels] + list(hidden_channels)
    keys = jax.random.split(key, 2 * len(hidden_channels) + 1)
    k = 0
    for i in range(len(hidden_channels)):
        fan_in = dims[i]
        scale = 1.0 / math.sqrt(fan_in)
        w = jax.random.uniform(keys[k], (dims[i + 1], dims[i]),
                               minval=-scale, maxval=scale, dtype=jnp.float32)
        b = jax.random.uniform(keys[k + 1], (dims[i + 1],),
                               minval=-scale, maxval=scale, dtype=jnp.float32)
        k += 2
        params["lin_w"].append(w)
        params["lin_b"].append(b)
    h = hidden_channels[-1]
    scale = 1.0 / math.sqrt(h)
    params["bilin_w"] = jax.random.uniform(keys[k], (h, h),
                                           minval=-scale, maxval=scale,
                                           dtype=jnp.float32)
    return params


def _reference(x_i, x_j, params):
    hi, hj = x_i, x_j
    for w, b in zip(params["lin_w"], params["lin_b"]):
        hi = _gelu_exact(hi @ w.T + b)
        hj = _gelu_exact(hj @ w.T + b)
    score = jnp.sum((hi @ params["bilin_w"].T) * hj, axis=-1)
    return score, hi, hj


if __name__ == "__main__":
    # Small shapes consistent with the module: num_layers=2,
    # in_channels=32, hidden_channels=[64, 32], batch of 16 node-pair rows.
    in_channels = 32
    hidden_channels = [64, 32]
    n = 16

    key = jax.random.PRNGKey(0)
    k_xi, k_xj, k_p = jax.random.split(key, 3)
    x_i = jax.random.normal(k_xi, (n, in_channels), dtype=jnp.float32)
    x_j = jax.random.normal(k_xj, (n, in_channels), dtype=jnp.float32)
    params = _init_params(k_p, in_channels, hidden_channels)

    ref_score, ref_i, ref_j = _reference(x_i, x_j, params)

    # Exact path: f32 MXU at HIGHEST precision -> tight tolerance.
    fwd32 = make_mlp_bil_predictor(params, mm_dtype=jnp.float32)
    score32, hi32, hj32 = fwd32(x_i, x_j)
    jax.block_until_ready((score32, hi32, hj32))
    assert score32.shape == (n,) and hi32.shape == (n, hidden_channels[-1])
    assert jnp.allclose(score32, ref_score, atol=1e-4, rtol=1e-4)
    assert jnp.allclose(hi32, ref_i, atol=1e-4, rtol=1e-4)
    assert jnp.allclose(hj32, ref_j, atol=1e-4, rtol=1e-4)

    # Default bf16-MXU path (f32 accumulation + f32 elementwise): looser tol.
    fwd_bf = make_mlp_bil_predictor(params)
    score_bf, hi_bf, hj_bf = fwd_bf(x_i, x_j)
    jax.block_until_ready((score_bf, hi_bf, hj_bf))
    assert jnp.allclose(score_bf, ref_score, atol=5e-2, rtol=5e-2)
    assert jnp.allclose(hi_bf, ref_i, atol=5e-2, rtol=5e-2)
    assert jnp.allclose(hj_bf, ref_j, atol=5e-2, rtol=5e-2)

    # Multi-block + ragged batch (n=300 -> tile 128, 3 grid steps): exercises
    # zero-padding, lane-dense score blocks, and the stacked hidden output.
    n2 = 300
    k2i, k2j = jax.random.split(jax.random.PRNGKey(1), 2)
    x2_i = jax.random.normal(k2i, (n2, in_channels), dtype=jnp.float32)
    x2_j = jax.random.normal(k2j, (n2, in_channels), dtype=jnp.float32)
    ref2_score, ref2_i, ref2_j = _reference(x2_i, x2_j, params)
    s2, h2i, h2j = fwd32(x2_i, x2_j)
    jax.block_until_ready((s2, h2i, h2j))
    assert s2.shape == (n2,)
    assert jnp.allclose(s2, ref2_score, atol=1e-4, rtol=1e-4)
    assert jnp.allclose(h2i, ref2_i, atol=1e-4, rtol=1e-4)
    assert jnp.allclose(h2j, ref2_j, atol=1e-4, rtol=1e-4)

    print("KERNEL_OK")
</pallas_src>

<mosaic_0001>
module attributes {stable_mosaic.version = 11 : i64} {
  func.func @kernel(%arg0: i32, %arg1: memref<2x16x32xf32, #tpu.memory_space<vmem>>, %arg2: memref<32x64xf32, #tpu.memory_space<vmem>>, %arg3: memref<1x64xf32, #tpu.memory_space<vmem>>, %arg4: memref<64x32xf32, #tpu.memory_space<vmem>>, %arg5: memref<1x32xf32, #tpu.memory_space<vmem>>, %arg6: memref<32x32xf32, #tpu.memory_space<vmem>>, %arg7: memref<1x16xf32, #tpu.memory_space<vmem>>, %arg8: memref<2x16x32xf32, #tpu.memory_space<vmem>>) attributes {dimension_semantics = [#tpu.dimension_semantics<parallel>], iteration_bounds = array<i64: 1>, scalar_prefetch = 0 : i64, scratch_operands = 0 : i64, tpu.core_type = #tpu.core_type<tc>, window_params = [{transform_indices = @transform_0, window_bounds = array<i64: 2, 16, 32>}, {pipeline_mode = #tpu.pipeline_mode<synchronous>, transform_indices = @transform_1, window_bounds = array<i64: 32, 64>}, {pipeline_mode = #tpu.pipeline_mode<synchronous>, transform_indices = @transform_2, window_bounds = array<i64: 1, 64>}, {pipeline_mode = #tpu.pipeline_mode<synchronous>, transform_indices = @transform_3, window_bounds = array<i64: 64, 32>}, {pipeline_mode = #tpu.pipeline_mode<synchronous>, transform_indices = @transform_4, window_bounds = array<i64: 1, 32>}, {pipeline_mode = #tpu.pipeline_mode<synchronous>, transform_indices = @transform_5, window_bounds = array<i64: 32, 32>}, {transform_indices = @transform_6, window_bounds = array<i64: 1, 16>}, {transform_indices = @transform_7, window_bounds = array<i64: 2, 16, 32>}]} {
    %c0 = arith.constant 0 : index
    %c0_0 = arith.constant 0 : index
    %c0_1 = arith.constant 0 : index
    %0 = vector.load %arg1[%c0, %c0_0, %c0_1] : memref<2x16x32xf32, #tpu.memory_space<vmem>>, vector<2x16x32xf32>
    %1 = vector.shape_cast %0 : vector<2x16x32xf32> to vector<32x32xf32>
    %c0_2 = arith.constant 0 : index
    %c0_3 = arith.constant 0 : index
    %2 = vector.load %arg2[%c0_2, %c0_3] : memref<32x64xf32, #tpu.memory_space<vmem>>, vector<32x64xf32>
    %c0_4 = arith.constant 0 : index
    %c0_5 = arith.constant 0 : index
    %3 = vector.load %arg3[%c0_4, %c0_5] : memref<1x64xf32, #tpu.memory_space<vmem>>, vector<1x64xf32>
    %cst = arith.constant dense<0.000000e+00> : vector<32x64xf32>
    %4 = tpu.matmul %1, %2, %cst {dimension_numbers = #tpu.dot_dimension_numbers<[1], [0], [0], [1], [0, 0, 1, 1], [], []>, precision = #tpu.contract_precision<fp32>} : vector<32x32xf32>, vector<32x64xf32>, vector<32x64xf32> -> vector<32x64xf32>
    %5 = vector.broadcast %3 : vector<1x64xf32> to vector<32x64xf32>
    %6 = arith.addf %4, %5 : vector<32x64xf32>
    %cst_6 = arith.constant 5.000000e-01 : f32
    %7 = vector.broadcast %cst_6 : f32 to vector<32x64xf32>
    %8 = arith.mulf %7, %6 : vector<32x64xf32>
    %cst_7 = arith.constant 0.707106769 : f32
    %9 = vector.broadcast %cst_7 : f32 to vector<32x64xf32>
    %10 = arith.mulf %6, %9 : vector<32x64xf32>
    %11 = math.erf %10 : vector<32x64xf32>
    %cst_8 = arith.constant 1.000000e+00 : f32
    %12 = vector.broadcast %cst_8 : f32 to vector<32x64xf32>
    %13 = arith.addf %12, %11 : vector<32x64xf32>
    %14 = arith.mulf %8, %13 : vector<32x64xf32>
    %c0_9 = arith.constant 0 : index
    %c0_10 = arith.constant 0 : index
    %15 = vector.load %arg4[%c0_9, %c0_10] : memref<64x32xf32, #tpu.memory_space<vmem>>, vector<64x32xf32>
    %c0_11 = arith.constant 0 : index
    %c0_12 = arith.constant 0 : index
    %16 = vector.load %arg5[%c0_11, %c0_12] : memref<1x32xf32, #tpu.memory_space<vmem>>, vector<1x32xf32>
    %cst_13 = arith.constant dense<0.000000e+00> : vector<32x32xf32>
    %17 = tpu.matmul %14, %15, %cst_13 {dimension_numbers = #tpu.dot_dimension_numbers<[1], [0], [0], [1], [0, 0, 1, 1], [], []>, precision = #tpu.contract_precision<fp32>} : vector<32x64xf32>, vector<64x32xf32>, vector<32x32xf32> -> vector<32x32xf32>
    %18 = vector.broadcast %16 : vector<1x32xf32> to vector<32x32xf32>
    %19 = arith.addf %17, %18 : vector<32x32xf32>
    %cst_14 = arith.constant 5.000000e-01 : f32
    %20 = vector.broadcast %cst_14 : f32 to vector<32x32xf32>
    %21 = arith.mulf %20, %19 : vector<32x32xf32>
    %cst_15 = arith.constant 0.707106769 : f32
    %22 = vector.broadcast %cst_15 : f32 to vector<32x32xf32>
    %23 = arith.mulf %19, %22 : vector<32x32xf32>
    %24 = math.erf %23 : vector<32x32xf32>
    %cst_16 = arith.constant 1.000000e+00 : f32
    %25 = vector.broadcast %cst_16 : f32 to vector<32x32xf32>
    %26 = arith.addf %25, %24 : vector<32x32xf32>
    %27 = arith.mulf %21, %26 : vector<32x32xf32>
    %c0_17 = arith.constant 0 : index
    %c0_18 = arith.constant 0 : index
    %28 = vector.load %arg6[%c0_17, %c0_18] : memref<32x32xf32, #tpu.memory_space<vmem>>, vector<32x32xf32>
    %29 = vector.extract_strided_slice %27 {offsets = [0, 0], sizes = [16, 32], strides = [1, 1]} : vector<32x32xf32> to vector<16x32xf32>
    %30 = vector.extract_strided_slice %27 {offsets = [16, 0], sizes = [16, 32], strides = [1, 1]} : vector<32x32xf32> to vector<16x32xf32>
    %cst_19 = arith.constant dense<0.000000e+00> : vector<16x32xf32>
    %31 = tpu.matmul %29, %28, %cst_19 {dimension_numbers = #tpu.dot_dimension_numbers<[1], [0], [0], [1], [0, 0, 1, 1], [], []>, precision = #tpu.contract_precision<fp32>} : vector<16x32xf32>, vector<32x32xf32>, vector<16x32xf32> -> vector<16x32xf32>
    %32 = arith.mulf %31, %30 : vector<16x32xf32>
    %cst_20 = arith.constant dense<0.000000e+00> : vector<16xf32>
    %33 = vector.multi_reduction <add>, %32, %cst_20 [1] : vector<16x32xf32> to vector<16xf32>
    %34 = vector.shape_cast %33 : vector<16xf32> to vector<1x16xf32>
    %c0_21 = arith.constant 0 : index
    %c0_22 = arith.constant 0 : index
    %35 = vector.load %arg7[%c0_21, %c0_22] : memref<1x16xf32, #tpu.memory_space<vmem>>, vector<1x16xf32>
    tpu.vector_store %arg7[%c0_21, %c0_22], %34 {strides = array<i32>} : memref<1x16xf32, #tpu.memory_space<vmem>>, vector<1x16xf32>,
    %36 = vector.shape_cast %27 : vector<32x32xf32> to vector<2x16x32xf32>
    %c0_23 = arith.constant 0 : index
    %c0_24 = arith.constant 0 : index
    %c0_25 = arith.constant 0 : index
    %37 = vector.load %arg8[%c0_23, %c0_24, %c0_25] : memref<2x16x32xf32, #tpu.memory_space<vmem>>, vector<2x16x32xf32>
    tpu.vector_store %arg8[%c0_23, %c0_24, %c0_25], %36 {strides = array<i32>} : memref<2x16x32xf32, #tpu.memory_space<vmem>>, vector<2x16x32xf32>,
    return
  }
  func.func @transform_0(%arg0: i32) -> (i32, i32, i32) {
    %c0_i32 = arith.constant 0 : i32
    %c0_i32_0 = arith.constant 0 : i32
    %c0_i32_1 = arith.constant 0 : i32
    return %c0_i32, %arg0, %c0_i32_0 : i32, i32, i32
  }
  func.func @transform_1(%arg0: i32) -> (i32, i32) {
    %c0_i32 = arith.constant 0 : i32
    %c0_i32_0 = arith.constant 0 : i32
    %c0_i32_1 = arith.constant 0 : i32
    return %c0_i32, %c0_i32_0 : i32, i32
  }
  func.func @transform_2(%arg0: i32) -> (i32, i32) {
    %c0_i32 = arith.constant 0 : i32
    %c0_i32_0 = arith.constant 0 : i32
    %c0_i32_1 = arith.constant 0 : i32
    return %c0_i32, %c0_i32_0 : i32, i32
  }
  func.func @transform_3(%arg0: i32) -> (i32, i32) {
    %c0_i32 = arith.constant 0 : i32
    %c0_i32_0 = arith.constant 0 : i32
    %c0_i32_1 = arith.constant 0 : i32
    return %c0_i32, %c0_i32_0 : i32, i32
  }
  func.func @transform_4(%arg0: i32) -> (i32, i32) {
    %c0_i32 = arith.constant 0 : i32
    %c0_i32_0 = arith.constant 0 : i32
    %c0_i32_1 = arith.constant 0 : i32
    return %c0_i32, %c0_i32_0 : i32, i32
  }
  func.func @transform_5(%arg0: i32) -> (i32, i32) {
    %c0_i32 = arith.constant 0 : i32
    %c0_i32_0 = arith.constant 0 : i32
    %c0_i32_1 = arith.constant 0 : i32
    return %c0_i32, %c0_i32_0 : i32, i32
  }
  func.func @transform_6(%arg0: i32) -> (i32, i32) {
    %c0_i32 = arith.constant 0 : i32
    %c0_i32_0 = arith.constant 0 : i32
    return %c0_i32, %arg0 : i32, i32
  }
  func.func @transform_7(%arg0: i32) -> (i32, i32, i32) {
    %c0_i32 = arith.constant 0 : i32
    %c0_i32_0 = arith.constant 0 : i32
    %c0_i32_1 = arith.constant 0 : i32
    return %c0_i32, %arg0, %c0_i32_0 : i32, i32, i32
  }
}

</mosaic_0001>

<llo_original>
// kernel: forward.1
$region0: #{forward.1}
  #allocation0 [shape = 'u32[]', space=smem, size = 0x4, offset = 0x4, fixed_abs, tag = 'smem constant byte address 0x4 - core index']
  #allocation1 [shape = 'u32[72,128]{1,0:T(1,128)}', space=vmem, size = 0x9000, scoped, tag = 'internal scratch']
  %s0 = inlined_call_operand.vmem [shape: f32[2,16,32], index: 0, kind: input, shape index: {}]
  %s1 = inlined_call_operand.hbm [shape: f32[32,64], index: 1, kind: input, shape index: {}]
  %s2 = inlined_call_operand.vmem [shape: f32[1,64], index: 2, kind: input, shape index: {}]
  %s3 = inlined_call_operand.vmem [shape: f32[64,32], index: 3, kind: input, shape index: {}]
  %s4 = inlined_call_operand.vmem [shape: f32[1,32], index: 4, kind: input, shape index: {}]
  %s5 = inlined_call_operand.hbm [shape: f32[32,32], index: 5, kind: input, shape index: {}]
  %s6 = inlined_call_operand.hbm [shape: f32[1,16], index: 6, kind: output, shape index: {0}]
  %s7 = inlined_call_operand.vmem [shape: f32[2,16,32], index: 7, kind: output, shape index: {1}]
  %8 = xla_tuple %s6, %s7
  %s9 = sld [smem:[#allocation0]]
  $region50: #{forward.1} parent=0
    _
  %s11 = ssub.s32 1, %s9
  %s12 = scalar_select 0, %s11, %s9
  $region1: #{forward.1} parent=0
    #allocation2 [shape = 'u8[16384]{0}', space=vmem, size = 0x4000, scoped, tag = 'input window, operand 1, single buffered']
    #allocation3 [shape = 's32[1]{0}', space=sflag, size = 0x4, scoped, tag = 'scoped memory for forward.1']
    #allocation4 [shape = 's32[1]{0}', space=sflag, size = 0x4, scoped, tag = 'scoped memory for forward.1']
    #allocation5 [shape = 'u8[16384]{0}', space=vmem, size = 0x4000, scoped, tag = 'input window, operand 5, single buffered']
    #allocation6 [shape = 's32[1]{0}', space=sflag, size = 0x4, scoped, tag = 'scoped memory for forward.1']
    #allocation7 [shape = 'u8[512]{0}', space=vmem, size = 0x400, scoped, tag = 'output window, operand 0, single buffered']
    %13 = vsyncpa [#allocation3], 0
    %14 = vsyncpa [#allocation6], 0
    %15 = vsyncpa [#allocation4], 0
    // Predicated region
    $region2: #{forward.1} parent=1 // pred_check
      _
    $region3: #{forward.1} parent=1 // pred_check_branch
      %17 = sbr.rel (0) target = $region5
    $region4: #{forward.1} parent=1 // pred_region
      _
    $region5: #{forward.1} parent=1 // pred_fallthru
      _
    // Predicated region
    $region6: #{forward.1} parent=1 // pred_check
      _
    $region7: #{forward.1} parent=1 // pred_check_branch
      %19 = sbr.rel (0) target = $region9
    $region8: #{forward.1} parent=1 // pred_region
      %21 = vsyncadd [#allocation3], 0
      %s22 = sshll.u32 %s1, 4
      %s23 = int_to_ptr.hbm [resolvable:$true] %s22
      %s24 = sshll.u32 [#allocation2], 4
      %s25 = int_to_ptr.vmem [resolvable:$true] %s24
      %30 = dma.hbm_to_vmem [thread:$0]  %s23, 512, %s25, [#allocation3], 128, 128, 8
    $region9: #{forward.1} parent=1 // pred_fallthru
      _
    // Predicated region
    $region10: #{forward.1} parent=1 // pred_check
      _
    $region11: #{forward.1} parent=1 // pred_check_branch
      %32 = sbr.rel (0) target = $region13
    $region12: #{forward.1} parent=1 // pred_region
      _
    $region13: #{forward.1} parent=1 // pred_fallthru
      _
    // Predicated region
    $region14: #{forward.1} parent=1 // pred_check
      _
    $region15: #{forward.1} parent=1 // pred_check_branch
      %34 = sbr.rel (0) target = $region17
    $region16: #{forward.1} parent=1 // pred_region
      _
    $region17: #{forward.1} parent=1 // pred_fallthru
      _
    // Predicated region
    $region18: #{forward.1} parent=1 // pred_check
      _
    $region19: #{forward.1} parent=1 // pred_check_branch
      %36 = sbr.rel (0) target = $region21
    $region20: #{forward.1} parent=1 // pred_region
      _
    $region21: #{forward.1} parent=1 // pred_fallthru
      _
    // Predicated region
    $region22: #{forward.1} parent=1 // pred_check
      _
    $region23: #{forward.1} parent=1 // pred_check_branch
      %38 = sbr.rel (0) target = $region25
    $region24: #{forward.1} parent=1 // pred_region
      %40 = vsyncadd [#allocation6], 0
      %s41 = sshll.u32 %s5, 4
      %s42 = int_to_ptr.hbm [resolvable:$true] %s41
      %s43 = sshll.u32 [#allocation5], 4
      %s44 = int_to_ptr.vmem [resolvable:$true] %s43
      %49 = dma.hbm_to_vmem [thread:$0]  %s42, 512, %s44, [#allocation6], 128, 128, 8
    $region25: #{forward.1} parent=1 // pred_fallthru
      _
    // Predicated region
    $region26: #{forward.1} parent=1 // pred_check
      _
    $region27: #{forward.1} parent=1 // pred_check_branch
      %51 = sbr.rel (0) target = $region29
    $region28: #{forward.1} parent=1 // pred_region
      %53 = dma.done [#allocation3], 512
    $region29: #{forward.1} parent=1 // pred_fallthru
      _
    // Predicated region
    $region30: #{forward.1} parent=1 // pred_check
      _
    $region31: #{forward.1} parent=1 // pred_check_branch
      %55 = sbr.rel (0) target = $region33
    $region32: #{forward.1} parent=1 // pred_region
      %57 = dma.done [#allocation6], 512
    $region33: #{forward.1} parent=1 // pred_fallthru
      _
    %v58 = vld [vmem:[%s0] sm:$0xff]
    %v59 = vld [vmem:[%s0 + $0x8] sm:$0xff]
    %v60 = vld [vmem:[%s0 + $0x10] sm:$0xff]
    %v61 = vld [vmem:[%s0 + $0x18] sm:$0xff]
    %v62 = vld [vmem:[#allocation2] sm:$0xff]
    %v63 = vld [vmem:[#allocation2 + $0x8] sm:$0xff]
    %v64 = vld [vmem:[#allocation2 + $0x10] sm:$0xff]
    %v65 = vld [vmem:[#allocation2 + $0x18] sm:$0xff]
    %v66 = vld [vmem:[%s2] sm:$0x1]
    %v68 = vperm.slane %v66, 0
    %vm70 = vcmask 261120
    %v72 = vsel %vm70, %v58, 0
    %v75 = vsel %vm70, %v59, 0
    %v78 = vsel %vm70, %v60, 0
    %v81 = vsel %vm70, %v61, 0
    %83 = vmatpush.msra.mxu0 0.0
    %84 = vmatpush.msra.mxu0 0.0
    %85 = vmatpush.msra.mxu0 0.0
    %86 = vmatpush.msra.mxu0 0.0
    %87 = vmatpush.msra.mxu0 0.0
    %88 = vmatpush.msra.mxu0 0.0
    %89 = vmatpush.msra.mxu0 0.0
    %90 = vmatpush.msra.mxu0 0.0
    %91 = vmatpush.msra.mxu0 0.0
    %92 = vmatpush.msra.mxu0 0.0
    %93 = vmatpush.msra.mxu0 0.0
    %94 = vmatpush.msra.mxu0 0.0
    %v95 = vand.u32 %v65, 4294901760
    %96 = vmatpush.msra.mxu0 %v95
    %v97 = vand.u32 %v64, 4294901760
    %98 = vmatpush.msra.mxu0 %v97
    %v99 = vand.u32 %v63, 4294901760
    %100 = vmatpush.msra.mxu0 %v99
    %v101 = vand.u32 %v62, 4294901760
    %102 = vmatpush.msra.mxu0 %v101
    %v103 = vand.u32 %v72, 4294901760
    %v104 = vsub.f32 %v72, %v103
    %v105 = vand.u32 %v104, 4294901760
    %v106 = vsub.f32 %v104, %v105
    %v107 = vand.u32 %v106, 4294901760
    %108 = vmatmul.f32.gmra.mxu0 %v107
    %v109 = vpop.f32.mrf.mxu0
    %v110 = vadd.f32 %v68, %v109
    %v111 = vand.u32 %v75, 4294901760
    %v112 = vsub.f32 %v75, %v111
    %v113 = vand.u32 %v112, 4294901760
    %v114 = vsub.f32 %v112, %v113
    %v115 = vand.u32 %v114, 4294901760
    %116 = vmatmul.f32.gmra.mxu0 %v115
    %v117 = vpop.f32.mrf.mxu0
    %v118 = vadd.f32 %v68, %v117
    %v119 = vand.u32 %v78, 4294901760
    %v120 = vsub.f32 %v78, %v119
    %v121 = vand.u32 %v120, 4294901760
    %v122 = vsub.f32 %v120, %v121
    %v123 = vand.u32 %v122, 4294901760
    %124 = vmatmul.f32.gmra.mxu0 %v123
    %v125 = vpop.f32.mrf.mxu0
    %v126 = vadd.f32 %v68, %v125
    %v127 = vand.u32 %v81, 4294901760
    %v128 = vsub.f32 %v81, %v127
    %v129 = vand.u32 %v128, 4294901760
    %v130 = vsub.f32 %v128, %v129
    %v131 = vand.u32 %v130, 4294901760
    %132 = vmatmul.f32.gmra.mxu0 %v131
    %v133 = vpop.f32.mrf.mxu0
    %v134 = vadd.f32 %v68, %v133
    %135 = vdwg.mxu0
    %136 = vmatpush.msra.mxu0 0.0
    %137 = vmatpush.msra.mxu0 0.0
    %138 = vmatpush.msra.mxu0 0.0
    %139 = vmatpush.msra.mxu0 0.0
    %140 = vmatpush.msra.mxu0 0.0
    %141 = vmatpush.msra.mxu0 0.0
    %142 = vmatpush.msra.mxu0 0.0
    %143 = vmatpush.msra.mxu0 0.0
    %144 = vmatpush.msra.mxu0 0.0
    %145 = vmatpush.msra.mxu0 0.0
    %146 = vmatpush.msra.mxu0 0.0
    %147 = vmatpush.msra.mxu0 0.0
    %v148 = vand.u32 %v65, 4294901760
    %v149 = vsub.f32 %v65, %v148
    %v150 = vand.u32 %v149, 4294901760
    %v151 = vsub.f32 %v149, %v150
    %v152 = vand.u32 %v151, 4294901760
    %153 = vmatpush.msra.mxu0 %v152
    %v154 = vand.u32 %v64, 4294901760
    %v155 = vsub.f32 %v64, %v154
    %v156 = vand.u32 %v155, 4294901760
    %v157 = vsub.f32 %v155, %v156
    %v158 = vand.u32 %v157, 4294901760
    %159 = vmatpush.msra.mxu0 %v158
    %v160 = vand.u32 %v63, 4294901760
    %v161 = vsub.f32 %v63, %v160
    %v162 = vand.u32 %v161, 4294901760
    %v163 = vsub.f32 %v161, %v162
    %v164 = vand.u32 %v163, 4294901760
    %165 = vmatpush.msra.mxu0 %v164
    %v166 = vand.u32 %v62, 4294901760
    %v167 = vsub.f32 %v62, %v166
    %v168 = vand.u32 %v167, 4294901760
    %v169 = vsub.f32 %v167, %v168
    %v170 = vand.u32 %v169, 4294901760
    %171 = vmatpush.msra.mxu0 %v170
    %v172 = vand.u32 %v72, 4294901760
    %173 = vmatmul.f32.gmra.mxu0 %v172
    %v174 = vpop.f32.mrf.mxu0
    %v175 = vadd.f32 %v110, %v174
    %v176 = vand.u32 %v75, 4294901760
    %177 = vmatmul.f32.gmra.mxu0 %v176
    %v178 = vpop.f32.mrf.mxu0
    %v179 = vadd.f32 %v118, %v178
    %v180 = vand.u32 %v78, 4294901760
    %181 = vmatmul.f32.gmra.mxu0 %v180
    %v182 = vpop.f32.mrf.mxu0
    %v183 = vadd.f32 %v126, %v182
    %v184 = vand.u32 %v81, 4294901760
    %185 = vmatmul.f32.gmra.mxu0 %v184
    %v186 = vpop.f32.mrf.mxu0
    %v187 = vadd.f32 %v134, %v186
    %188 = vdwg.mxu0
    %189 = vmatpush.msra.mxu0 0.0
    %190 = vmatpush.msra.mxu0 0.0
    %191 = vmatpush.msra.mxu0 0.0
    %192 = vmatpush.msra.mxu0 0.0
    %193 = vmatpush.msra.mxu0 0.0
    %194 = vmatpush.msra.mxu0 0.0
    %195 = vmatpush.msra.mxu0 0.0
    %196 = vmatpush.msra.mxu0 0.0
    %197 = vmatpush.msra.mxu0 0.0
    %198 = vmatpush.msra.mxu0 0.0
    %199 = vmatpush.msra.mxu0 0.0
    %200 = vmatpush.msra.mxu0 0.0
    %v201 = vand.u32 %v65, 4294901760
    %v202 = vsub.f32 %v65, %v201
    %203 = vmatpush.msra.mxu0 %v202
    %v204 = vand.u32 %v64, 4294901760
    %v205 = vsub.f32 %v64, %v204
    %206 = vmatpush.msra.mxu0 %v205
    %v207 = vand.u32 %v63, 4294901760
    %v208 = vsub.f32 %v63, %v207
    %209 = vmatpush.msra.mxu0 %v208
    %v210 = vand.u32 %v62, 4294901760
    %v211 = vsub.f32 %v62, %v210
    %212 = vmatpush.msra.mxu0 %v211
    %v213 = vand.u32 %v72, 4294901760
    %v214 = vsub.f32 %v72, %v213
    %215 = vmatmul.f32.gmra.mxu0 %v214
    %v216 = vpop.f32.mrf.mxu0
    %v217 = vadd.f32 %v175, %v216
    %v218 = vand.u32 %v75, 4294901760
    %v219 = vsub.f32 %v75, %v218
    %220 = vmatmul.f32.gmra.mxu0 %v219
    %v221 = vpop.f32.mrf.mxu0
    %v222 = vadd.f32 %v179, %v221
    %v223 = vand.u32 %v78, 4294901760
    %v224 = vsub.f32 %v78, %v223
    %225 = vmatmul.f32.gmra.mxu0 %v224
    %v226 = vpop.f32.mrf.mxu0
    %v227 = vadd.f32 %v183, %v226
    %v228 = vand.u32 %v81, 4294901760
    %v229 = vsub.f32 %v81, %v228
    %230 = vmatmul.f32.gmra.mxu0 %v229
    %v231 = vpop.f32.mrf.mxu0
    %v232 = vadd.f32 %v187, %v231
    %233 = vdwg.mxu0
    %234 = vmatpush.msra.mxu0 0.0
    %235 = vmatpush.msra.mxu0 0.0
    %236 = vmatpush.msra.mxu0 0.0
    %237 = vmatpush.msra.mxu0 0.0
    %238 = vmatpush.msra.mxu0 0.0
    %239 = vmatpush.msra.mxu0 0.0
    %240 = vmatpush.msra.mxu0 0.0
    %241 = vmatpush.msra.mxu0 0.0
    %242 = vmatpush.msra.mxu0 0.0
    %243 = vmatpush.msra.mxu0 0.0
    %244 = vmatpush.msra.mxu0 0.0
    %245 = vmatpush.msra.mxu0 0.0
    %v246 = vand.u32 %v65, 4294901760
    %247 = vmatpush.msra.mxu0 %v246
    %v248 = vand.u32 %v64, 4294901760
    %249 = vmatpush.msra.mxu0 %v248
    %v250 = vand.u32 %v63, 4294901760
    %251 = vmatpush.msra.mxu0 %v250
    %v252 = vand.u32 %v62, 4294901760
    %253 = vmatpush.msra.mxu0 %v252
    %v254 = vand.u32 %v72, 4294901760
    %v255 = vsub.f32 %v72, %v254
    %v256 = vand.u32 %v255, 4294901760
    %257 = vmatmul.f32.gmra.mxu0 %v256
    %v258 = vpop.f32.mrf.mxu0
    %v259 = vadd.f32 %v217, %v258
    %v260 = vand.u32 %v75, 4294901760
    %v261 = vsub.f32 %v75, %v260
    %v262 = vand.u32 %v261, 4294901760
    %263 = vmatmul.f32.gmra.mxu0 %v262
    %v264 = vpop.f32.mrf.mxu0
    %v265 = vadd.f32 %v222, %v264
    %v266 = vand.u32 %v78, 4294901760
    %v267 = vsub.f32 %v78, %v266
    %v268 = vand.u32 %v267, 4294901760
    %269 = vmatmul.f32.gmra.mxu0 %v268
    %v270 = vpop.f32.mrf.mxu0
    %v271 = vadd.f32 %v227, %v270
    %v272 = vand.u32 %v81, 4294901760
    %v273 = vsub.f32 %v81, %v272
    %v274 = vand.u32 %v273, 4294901760
    %275 = vmatmul.f32.gmra.mxu0 %v274
    %v276 = vpop.f32.mrf.mxu0
    %v277 = vadd.f32 %v232, %v276
    %278 = vdwg.mxu0
    %279 = vmatpush.msra.mxu0 0.0
    %280 = vmatpush.msra.mxu0 0.0
    %281 = vmatpush.msra.mxu0 0.0
    %282 = vmatpush.msra.mxu0 0.0
    %283 = vmatpush.msra.mxu0 0.0
    %284 = vmatpush.msra.mxu0 0.0
    %285 = vmatpush.msra.mxu0 0.0
    %286 = vmatpush.msra.mxu0 0.0
    %287 = vmatpush.msra.mxu0 0.0
    %288 = vmatpush.msra.mxu0 0.0
    %289 = vmatpush.msra.mxu0 0.0
    %290 = vmatpush.msra.mxu0 0.0
    %v291 = vand.u32 %v65, 4294901760
    %v292 = vsub.f32 %v65, %v291
    %v293 = vand.u32 %v292, 4294901760
    %294 = vmatpush.msra.mxu0 %v293
    %v295 = vand.u32 %v64, 4294901760
    %v296 = vsub.f32 %v64, %v295
    %v297 = vand.u32 %v296, 4294901760
    %298 = vmatpush.msra.mxu0 %v297
    %v299 = vand.u32 %v63, 4294901760
    %v300 = vsub.f32 %v63, %v299
    %v301 = vand.u32 %v300, 4294901760
    %302 = vmatpush.msra.mxu0 %v301
    %v303 = vand.u32 %v62, 4294901760
    %v304 = vsub.f32 %v62, %v303
    %v305 = vand.u32 %v304, 4294901760
    %306 = vmatpush.msra.mxu0 %v305
    %v307 = vand.u32 %v72, 4294901760
    %308 = vmatmul.f32.gmra.mxu0 %v307
    %v309 = vpop.f32.mrf.mxu0
    %v310 = vadd.f32 %v259, %v309
    %v311 = vand.u32 %v75, 4294901760
    %312 = vmatmul.f32.gmra.mxu0 %v311
    %v313 = vpop.f32.mrf.mxu0
    %v314 = vadd.f32 %v265, %v313
    %v315 = vand.u32 %v78, 4294901760
    %316 = vmatmul.f32.gmra.mxu0 %v315
    %v317 = vpop.f32.mrf.mxu0
    %v318 = vadd.f32 %v271, %v317
    %v319 = vand.u32 %v81, 4294901760
    %320 = vmatmul.f32.gmra.mxu0 %v319
    %v321 = vpop.f32.mrf.mxu0
    %v322 = vadd.f32 %v277, %v321
    %323 = vdwg.mxu0
    %324 = vmatpush.msra.mxu0 0.0
    %325 = vmatpush.msra.mxu0 0.0
    %326 = vmatpush.msra.mxu0 0.0
    %327 = vmatpush.msra.mxu0 0.0
    %328 = vmatpush.msra.mxu0 0.0
    %329 = vmatpush.msra.mxu0 0.0
    %330 = vmatpush.msra.mxu0 0.0
    %331 = vmatpush.msra.mxu0 0.0
    %332 = vmatpush.msra.mxu0 0.0
    %333 = vmatpush.msra.mxu0 0.0
    %334 = vmatpush.msra.mxu0 0.0
    %335 = vmatpush.msra.mxu0 0.0
    %v336 = vand.u32 %v65, 4294901760
    %337 = vmatpush.msra.mxu0 %v336
    %v338 = vand.u32 %v64, 4294901760
    %339 = vmatpush.msra.mxu0 %v338
    %v340 = vand.u32 %v63, 4294901760
    %341 = vmatpush.msra.mxu0 %v340
    %v342 = vand.u32 %v62, 4294901760
    %343 = vmatpush.msra.mxu0 %v342
    %v344 = vand.u32 %v72, 4294901760
    %345 = vmatmul.f32.gmra.mxu0 %v344
    %v346 = vpop.f32.mrf.mxu0
    %v347 = vadd.f32 %v310, %v346
    %v348 = vand.u32 %v75, 4294901760
    %349 = vmatmul.f32.gmra.mxu0 %v348
    %v350 = vpop.f32.mrf.mxu0
    %v351 = vadd.f32 %v314, %v350
    %v352 = vand.u32 %v78, 4294901760
    %353 = vmatmul.f32.gmra.mxu0 %v352
    %v354 = vpop.f32.mrf.mxu0
    %v355 = vadd.f32 %v318, %v354
    %v356 = vand.u32 %v81, 4294901760
    %357 = vmatmul.f32.gmra.mxu0 %v356
    %v358 = vpop.f32.mrf.mxu0
    %v359 = vadd.f32 %v322, %v358
    %360 = vdwg.mxu0
    %v361 = vmul.f32 %v347, 0.5
    %v362 = vmul.f32 %v351, 0.5
    %v363 = vmul.f32 %v355, 0.5
    %v364 = vmul.f32 %v359, 0.5
    %v365 = vmul.f32 %v347, 0.70710677
    %v366 = vmul.f32 %v351, 0.70710677
    %v367 = vmul.f32 %v355, 0.70710677
    %v368 = vmul.f32 %v359, 0.70710677
    %v369 = vmul.f32 %v365, %v365
    %v370 = vmin.f32 16.0, %v369
    %v371 = vmul.f32 %v370, 2.1237322e-06
    %v372 = vadd.f32 %v371, 0.00028619796
    %v373 = vmul.f32 %v370, %v372
    %v374 = vadd.f32 %v373, 0.0036580483
    %v375 = vmul.f32 %v370, %v374
    %v376 = vadd.f32 %v375, 0.05243302
    %v377 = vmul.f32 %v370, %v376
    %v378 = vadd.f32 %v377, 0.18741608
    %v379 = vmul.f32 %v370, %v378
    %v380 = vadd.f32 %v379, 1.1283791
    %v381 = vmul.f32 %v365, %v380
    %v382 = vmul.f32 %v370, 3.8918573e-05
    %v383 = vadd.f32 %v382, 0.001143296
    %v384 = vmul.f32 %v370, %v383
    %v385 = vadd.f32 %v384, 0.014752088
    %v386 = vmul.f32 %v370, %v385
    %v387 = vadd.f32 %v386, 0.112945676
    %v388 = vmul.f32 %v370, %v387
    %v389 = vadd.f32 %v388, 0.4994258
    %v390 = vmul.f32 %v370, %v389
    %v391 = vadd.f32 %v390, 1.0
    %v392 = vrcp.pop %v391
    %v393 = vmul.f32 %v391, %v392
    %v394 = vsub.f32 1.0, %v393
    %v395 = vmul.f32 %v392, %v394
    %v396 = vadd.f32 %v392, %v395
    %vm397 = vweird.f32 %v391
    %vm398 = vweird.f32 %v392
    %vm399 = vmor %vm397, %vm398
    %v400 = vsel %vm399, %v392, %v396
    %v401 = vand.u32 2147483647, %v391
    %vm402 = vcmp.eq.f32.partialorder %v401, 8.507059e+37
    %v403 = vand.u32 %v391, 2147483648
    %v404 = vor.u32 1.1754944e-38, %v403
    %v405 = vsel %vm402, %v404, %v400
    %v406 = vmul.f32 %v381, %v405
    %v407 = vmin.f32 %v406, 1.0
    %v408 = vmax.f32 %v407, -1.0
    %v409 = vmul.f32 %v366, %v366
    %v410 = vmin.f32 16.0, %v409
    %v411 = vmul.f32 %v410, 2.1237322e-06
    %v412 = vadd.f32 %v411, 0.00028619796
    %v413 = vmul.f32 %v410, %v412
    %v414 = vadd.f32 %v413, 0.0036580483
    %v415 = vmul.f32 %v410, %v414
    %v416 = vadd.f32 %v415, 0.05243302
    %v417 = vmul.f32 %v410, %v416
    %v418 = vadd.f32 %v417, 0.18741608
    %v419 = vmul.f32 %v410, %v418
    %v420 = vadd.f32 %v419, 1.1283791
    %v421 = vmul.f32 %v366, %v420
    %v422 = vmul.f32 %v410, 3.8918573e-05
    %v423 = vadd.f32 %v422, 0.001143296
    %v424 = vmul.f32 %v410, %v423
    %v425 = vadd.f32 %v424, 0.014752088
    %v426 = vmul.f32 %v410, %v425
    %v427 = vadd.f32 %v426, 0.112945676
    %v428 = vmul.f32 %v410, %v427
    %v429 = vadd.f32 %v428, 0.4994258
    %v430 = vmul.f32 %v410, %v429
    %v431 = vadd.f32 %v430, 1.0
    %v432 = vrcp.pop %v431
    %v433 = vmul.f32 %v431, %v432
    %v434 = vsub.f32 1.0, %v433
    %v435 = vmul.f32 %v432, %v434
    %v436 = vadd.f32 %v432, %v435
    %vm437 = vweird.f32 %v431
    %vm438 = vweird.f32 %v432
    %vm439 = vmor %vm437, %vm438
    %v440 = vsel %vm439, %v432, %v436
    %v441 = vand.u32 2147483647, %v431
    %vm442 = vcmp.eq.f32.partialorder %v441, 8.507059e+37
    %v443 = vand.u32 %v431, 2147483648
    %v444 = vor.u32 1.1754944e-38, %v443
    %v445 = vsel %vm442, %v444, %v440
    %v446 = vmul.f32 %v421, %v445
    %v447 = vmin.f32 %v446, 1.0
    %v448 = vmax.f32 %v447, -1.0
    %v449 = vmul.f32 %v367, %v367
    %v450 = vmin.f32 16.0, %v449
    %v451 = vmul.f32 %v450, 2.1237322e-06
    %v452 = vadd.f32 %v451, 0.00028619796
    %v453 = vmul.f32 %v450, %v452
    %v454 = vadd.f32 %v453, 0.0036580483
    %v455 = vmul.f32 %v450, %v454
    %v456 = vadd.f32 %v455, 0.05243302
    %v457 = vmul.f32 %v450, %v456
    %v458 = vadd.f32 %v457, 0.18741608
    %v459 = vmul.f32 %v450, %v458
    %v460 = vadd.f32 %v459, 1.1283791
    %v461 = vmul.f32 %v367, %v460
    %v462 = vmul.f32 %v450, 3.8918573e-05
    %v463 = vadd.f32 %v462, 0.001143296
    %v464 = vmul.f32 %v450, %v463
    %v465 = vadd.f32 %v464, 0.014752088
    %v466 = vmul.f32 %v450, %v465
    %v467 = vadd.f32 %v466, 0.112945676
    %v468 = vmul.f32 %v450, %v467
    %v469 = vadd.f32 %v468, 0.4994258
    %v470 = vmul.f32 %v450, %v469
    %v471 = vadd.f32 %v470, 1.0
    %v472 = vrcp.pop %v471
    %v473 = vmul.f32 %v471, %v472
    %v474 = vsub.f32 1.0, %v473
    %v475 = vmul.f32 %v472, %v474
    %v476 = vadd.f32 %v472, %v475
    %vm477 = vweird.f32 %v471
    %vm478 = vweird.f32 %v472
    %vm479 = vmor %vm477, %vm478
    %v480 = vsel %vm479, %v472, %v476
    %v481 = vand.u32 2147483647, %v471
    %vm482 = vcmp.eq.f32.partialorder %v481, 8.507059e+37
    %v483 = vand.u32 %v471, 2147483648
    %v484 = vor.u32 1.1754944e-38, %v483
    %v485 = vsel %vm482, %v484, %v480
    %v486 = vmul.f32 %v461, %v485
    %v487 = vmin.f32 %v486, 1.0
    %v488 = vmax.f32 %v487, -1.0
    %v489 = vmul.f32 %v368, %v368
    %v490 = vmin.f32 16.0, %v489
    %v491 = vmul.f32 %v490, 2.1237322e-06
    %v492 = vadd.f32 %v491, 0.00028619796
    %v493 = vmul.f32 %v490, %v492
    %v494 = vadd.f32 %v493, 0.0036580483
    %v495 = vmul.f32 %v490, %v494
    %v496 = vadd.f32 %v495, 0.05243302
    %v497 = vmul.f32 %v490, %v496
    %v498 = vadd.f32 %v497, 0.18741608
    %v499 = vmul.f32 %v490, %v498
    %v500 = vadd.f32 %v499, 1.1283791
    %v501 = vmul.f32 %v368, %v500
    %v502 = vmul.f32 %v490, 3.8918573e-05
    %v503 = vadd.f32 %v502, 0.001143296
    %v504 = vmul.f32 %v490, %v503
    %v505 = vadd.f32 %v504, 0.014752088
    %v506 = vmul.f32 %v490, %v505
    %v507 = vadd.f32 %v506, 0.112945676
    %v508 = vmul.f32 %v490, %v507
    %v509 = vadd.f32 %v508, 0.4994258
    %v510 = vmul.f32 %v490, %v509
    %v511 = vadd.f32 %v510, 1.0
    %v512 = vrcp.pop %v511
    %v513 = vmul.f32 %v511, %v512
    %v514 = vsub.f32 1.0, %v513
    %v515 = vmul.f32 %v512, %v514
    %v516 = vadd.f32 %v512, %v515
    %vm517 = vweird.f32 %v511
    %vm518 = vweird.f32 %v512
    %vm519 = vmor %vm517, %vm518
    %v520 = vsel %vm519, %v512, %v516
    %v521 = vand.u32 2147483647, %v511
    %vm522 = vcmp.eq.f32.partialorder %v521, 8.507059e+37
    %v523 = vand.u32 %v511, 2147483648
    %v524 = vor.u32 1.1754944e-38, %v523
    %v525 = vsel %vm522, %v524, %v520
    %v526 = vmul.f32 %v501, %v525
    %v527 = vmin.f32 %v526, 1.0
    %v528 = vmax.f32 %v527, -1.0
    %v529 = vadd.f32 %v408, 1.0
    %v530 = vadd.f32 %v448, 1.0
    %v531 = vadd.f32 %v488, 1.0
    %v532 = vadd.f32 %v528, 1.0
    %v533 = vmul.f32 %v361, %v529
    %v534 = vmul.f32 %v362, %v530
    %v535 = vmul.f32 %v363, %v531
    %v536 = vmul.f32 %v364, %v532
    %v537 = vld [vmem:[%s3] sm:$0xff]
    %v538 = vld [vmem:[%s3 + $0x8] sm:$0xff]
    %v539 = vld [vmem:[%s3 + $0x10] sm:$0xff]
    %v540 = vld [vmem:[%s3 + $0x18] sm:$0xff]
    %v541 = vld [vmem:[%s3 + $0x20] sm:$0xff]
    %v542 = vld [vmem:[%s3 + $0x28] sm:$0xff]
    %v543 = vld [vmem:[%s3 + $0x30] sm:$0xff]
    %v544 = vld [vmem:[%s3 + $0x38] sm:$0xff]
    %v545 = vld [vmem:[%s4] sm:$0x1]
    %v547 = vperm.slane %v545, 0
    %vm549 = vcmask 523264
    %v551 = vsel %vm549, %v533, 0
    %v554 = vsel %vm549, %v534, 0
    %v557 = vsel %vm549, %v535, 0
    %v560 = vsel %vm549, %v536, 0
    %562 = vmatpush.msra.mxu0 0.0
    %563 = vmatpush.msra.mxu0 0.0
    %564 = vmatpush.msra.mxu0 0.0
    %565 = vmatpush.msra.mxu0 0.0
    %566 = vmatpush.msra.mxu0 0.0
    %567 = vmatpush.msra.mxu0 0.0
    %568 = vmatpush.msra.mxu0 0.0
    %569 = vmatpush.msra.mxu0 0.0
    %v570 = vand.u32 %v544, 4294901760
    %571 = vmatpush.msra.mxu0 %v570
    %v572 = vand.u32 %v543, 4294901760
    %573 = vmatpush.msra.mxu0 %v572
    %v574 = vand.u32 %v542, 4294901760
    %575 = vmatpush.msra.mxu0 %v574
    %v576 = vand.u32 %v541, 4294901760
    %577 = vmatpush.msra.mxu0 %v576
    %v578 = vand.u32 %v540, 4294901760
    %579 = vmatpush.msra.mxu0 %v578
    %v580 = vand.u32 %v539, 4294901760
    %581 = vmatpush.msra.mxu0 %v580
    %v582 = vand.u32 %v538, 4294901760
    %583 = vmatpush.msra.mxu0 %v582
    %v584 = vand.u32 %v537, 4294901760
    %585 = vmatpush.msra.mxu0 %v584
    %v586 = vand.u32 %v551, 4294901760
    %v587 = vsub.f32 %v551, %v586
    %v588 = vand.u32 %v587, 4294901760
    %v589 = vsub.f32 %v587, %v588
    %v590 = vand.u32 %v589, 4294901760
    %591 = vmatmul.f32.gmra.mxu0 %v590
    %v592 = vpop.f32.mrf.mxu0
    %v593 = vadd.f32 %v547, %v592
    %v594 = vand.u32 %v554, 4294901760
    %v595 = vsub.f32 %v554, %v594
    %v596 = vand.u32 %v595, 4294901760
    %v597 = vsub.f32 %v595, %v596
    %v598 = vand.u32 %v597, 4294901760
    %599 = vmatmul.f32.gmra.mxu0 %v598
    %v600 = vpop.f32.mrf.mxu0
    %v601 = vadd.f32 %v547, %v600
    %v602 = vand.u32 %v557, 4294901760
    %v603 = vsub.f32 %v557, %v602
    %v604 = vand.u32 %v603, 4294901760
    %v605 = vsub.f32 %v603, %v604
    %v606 = vand.u32 %v605, 4294901760
    %607 = vmatmul.f32.gmra.mxu0 %v606
    %v608 = vpop.f32.mrf.mxu0
    %v609 = vadd.f32 %v547, %v608
    %v610 = vand.u32 %v560, 4294901760
    %v611 = vsub.f32 %v560, %v610
    %v612 = vand.u32 %v611, 4294901760
    %v613 = vsub.f32 %v611, %v612
    %v614 = vand.u32 %v613, 4294901760
    %615 = vmatmul.f32.gmra.mxu0 %v614
    %v616 = vpop.f32.mrf.mxu0
    %v617 = vadd.f32 %v547, %v616
    %618 = vdwg.mxu0
    %619 = vmatpush.msra.mxu0 0.0
    %620 = vmatpush.msra.mxu0 0.0
    %621 = vmatpush.msra.mxu0 0.0
    %622 = vmatpush.msra.mxu0 0.0
    %623 = vmatpush.msra.mxu0 0.0
    %624 = vmatpush.msra.mxu0 0.0
    %625 = vmatpush.msra.mxu0 0.0
    %626 = vmatpush.msra.mxu0 0.0
    %v627 = vand.u32 %v544, 4294901760
    %v628 = vsub.f32 %v544, %v627
    %v629 = vand.u32 %v628, 4294901760
    %v630 = vsub.f32 %v628, %v629
    %v631 = vand.u32 %v630, 4294901760
    %632 = vmatpush.msra.mxu0 %v631
    %v633 = vand.u32 %v543, 4294901760
    %v634 = vsub.f32 %v543, %v633
    %v635 = vand.u32 %v634, 4294901760
    %v636 = vsub.f32 %v634, %v635
    %v637 = vand.u32 %v636, 4294901760
    %638 = vmatpush.msra.mxu0 %v637
    %v639 = vand.u32 %v542, 4294901760
    %v640 = vsub.f32 %v542, %v639
    %v641 = vand.u32 %v640, 4294901760
    %v642 = vsub.f32 %v640, %v641
    %v643 = vand.u32 %v642, 4294901760
    %644 = vmatpush.msra.mxu0 %v643
    %v645 = vand.u32 %v541, 4294901760
    %v646 = vsub.f32 %v541, %v645
    %v647 = vand.u32 %v646, 4294901760
    %v648 = vsub.f32 %v646, %v647
    %v649 = vand.u32 %v648, 4294901760
    %650 = vmatpush.msra.mxu0 %v649
    %v651 = vand.u32 %v540, 4294901760
    %v652 = vsub.f32 %v540, %v651
    %v653 = vand.u32 %v652, 4294901760
    %v654 = vsub.f32 %v652, %v653
    %v655 = vand.u32 %v654, 4294901760
    %656 = vmatpush.msra.mxu0 %v655
    %v657 = vand.u32 %v539, 4294901760
    %v658 = vsub.f32 %v539, %v657
    %v659 = vand.u32 %v658, 4294901760
    %v660 = vsub.f32 %v658, %v659
    %v661 = vand.u32 %v660, 4294901760
    %662 = vmatpush.msra.mxu0 %v661
    %v663 = vand.u32 %v538, 4294901760
    %v664 = vsub.f32 %v538, %v663
    %v665 = vand.u32 %v664, 4294901760
    %v666 = vsub.f32 %v664, %v665
    %v667 = vand.u32 %v666, 4294901760
    %668 = vmatpush.msra.mxu0 %v667
    %v669 = vand.u32 %v537, 4294901760
    %v670 = vsub.f32 %v537, %v669
    %v671 = vand.u32 %v670, 4294901760
    %v672 = vsub.f32 %v670, %v671
    %v673 = vand.u32 %v672, 4294901760
    %674 = vmatpush.msra.mxu0 %v673
    %v675 = vand.u32 %v551, 4294901760
    %676 = vmatmul.f32.gmra.mxu0 %v675
    %v677 = vpop.f32.mrf.mxu0
    %v678 = vadd.f32 %v593, %v677
    %v679 = vand.u32 %v554, 4294901760
    %680 = vmatmul.f32.gmra.mxu0 %v679
    %v681 = vpop.f32.mrf.mxu0
    %v682 = vadd.f32 %v601, %v681
    %v683 = vand.u32 %v557, 4294901760
    %684 = vmatmul.f32.gmra.mxu0 %v683
    %v685 = vpop.f32.mrf.mxu0
    %v686 = vadd.f32 %v609, %v685
    %v687 = vand.u32 %v560, 4294901760
    %688 = vmatmul.f32.gmra.mxu0 %v687
    %v689 = vpop.f32.mrf.mxu0
    %v690 = vadd.f32 %v617, %v689
    %691 = vdwg.mxu0
    %692 = vmatpush.msra.mxu0 0.0
    %693 = vmatpush.msra.mxu0 0.0
    %694 = vmatpush.msra.mxu0 0.0
    %695 = vmatpush.msra.mxu0 0.0
    %696 = vmatpush.msra.mxu0 0.0
    %697 = vmatpush.msra.mxu0 0.0
    %698 = vmatpush.msra.mxu0 0.0
    %699 = vmatpush.msra.mxu0 0.0
    %v700 = vand.u32 %v544, 4294901760
    %v701 = vsub.f32 %v544, %v700
    %702 = vmatpush.msra.mxu0 %v701
    %v703 = vand.u32 %v543, 4294901760
    %v704 = vsub.f32 %v543, %v703
    %705 = vmatpush.msra.mxu0 %v704
    %v706 = vand.u32 %v542, 4294901760
    %v707 = vsub.f32 %v542, %v706
    %708 = vmatpush.msra.mxu0 %v707
    %v709 = vand.u32 %v541, 4294901760
    %v710 = vsub.f32 %v541, %v709
    %711 = vmatpush.msra.mxu0 %v710
    %v712 = vand.u32 %v540, 4294901760
    %v713 = vsub.f32 %v540, %v712
    %714 = vmatpush.msra.mxu0 %v713
    %v715 = vand.u32 %v539, 4294901760
    %v716 = vsub.f32 %v539, %v715
    %717 = vmatpush.msra.mxu0 %v716
    %v718 = vand.u32 %v538, 4294901760
    %v719 = vsub.f32 %v538, %v718
    %720 = vmatpush.msra.mxu0 %v719
    %v721 = vand.u32 %v537, 4294901760
    %v722 = vsub.f32 %v537, %v721
    %723 = vmatpush.msra.mxu0 %v722
    %v724 = vand.u32 %v551, 4294901760
    %v725 = vsub.f32 %v551, %v724
    %726 = vmatmul.f32.gmra.mxu0 %v725
    %v727 = vpop.f32.mrf.mxu0
    %v728 = vadd.f32 %v678, %v727
    %v729 = vand.u32 %v554, 4294901760
    %v730 = vsub.f32 %v554, %v729
    %731 = vmatmul.f32.gmra.mxu0 %v730
    %v732 = vpop.f32.mrf.mxu0
    %v733 = vadd.f32 %v682, %v732
    %v734 = vand.u32 %v557, 4294901760
    %v735 = vsub.f32 %v557, %v734
    %736 = vmatmul.f32.gmra.mxu0 %v735
    %v737 = vpop.f32.mrf.mxu0
    %v738 = vadd.f32 %v686, %v737
    %v739 = vand.u32 %v560, 4294901760
    %v740 = vsub.f32 %v560, %v739
    %741 = vmatmul.f32.gmra.mxu0 %v740
    %v742 = vpop.f32.mrf.mxu0
    %v743 = vadd.f32 %v690, %v742
    %744 = vdwg.mxu0
    %745 = vmatpush.msra.mxu0 0.0
    %746 = vmatpush.msra.mxu0 0.0
    %747 = vmatpush.msra.mxu0 0.0
    %748 = vmatpush.msra.mxu0 0.0
    %749 = vmatpush.msra.mxu0 0.0
    %750 = vmatpush.msra.mxu0 0.0
    %751 = vmatpush.msra.mxu0 0.0
    %752 = vmatpush.msra.mxu0 0.0
    %v753 = vand.u32 %v544, 4294901760
    %754 = vmatpush.msra.mxu0 %v753
    %v755 = vand.u32 %v543, 4294901760
    %756 = vmatpush.msra.mxu0 %v755
    %v757 = vand.u32 %v542, 4294901760
    %758 = vmatpush.msra.mxu0 %v757
    %v759 = vand.u32 %v541, 4294901760
    %760 = vmatpush.msra.mxu0 %v759
    %v761 = vand.u32 %v540, 4294901760
    %762 = vmatpush.msra.mxu0 %v761
    %v763 = vand.u32 %v539, 4294901760
    %764 = vmatpush.msra.mxu0 %v763
    %v765 = vand.u32 %v538, 4294901760
    %766 = vmatpush.msra.mxu0 %v765
    %v767 = vand.u32 %v537, 4294901760
    %768 = vmatpush.msra.mxu0 %v767
    %v769 = vand.u32 %v551, 4294901760
    %v770 = vsub.f32 %v551, %v769
    %v771 = vand.u32 %v770, 4294901760
    %772 = vmatmul.f32.gmra.mxu0 %v771
    %v773 = vpop.f32.mrf.mxu0
    %v774 = vadd.f32 %v728, %v773
    %v775 = vand.u32 %v554, 4294901760
    %v776 = vsub.f32 %v554, %v775
    %v777 = vand.u32 %v776, 4294901760
    %778 = vmatmul.f32.gmra.mxu0 %v777
    %v779 = vpop.f32.mrf.mxu0
    %v780 = vadd.f32 %v733, %v779
    %v781 = vand.u32 %v557, 4294901760
    %v782 = vsub.f32 %v557, %v781
    %v783 = vand.u32 %v782, 4294901760
    %784 = vmatmul.f32.gmra.mxu0 %v783
    %v785 = vpop.f32.mrf.mxu0
    %v786 = vadd.f32 %v738, %v785
    %v787 = vand.u32 %v560, 4294901760
    %v788 = vsub.f32 %v560, %v787
    %v789 = vand.u32 %v788, 4294901760
    %790 = vmatmul.f32.gmra.mxu0 %v789
    %v791 = vpop.f32.mrf.mxu0
    %v792 = vadd.f32 %v743, %v791
    %793 = vdwg.mxu0
    %794 = vmatpush.msra.mxu0 0.0
    %795 = vmatpush.msra.mxu0 0.0
    %796 = vmatpush.msra.mxu0 0.0
    %797 = vmatpush.msra.mxu0 0.0
    %798 = vmatpush.msra.mxu0 0.0
    %799 = vmatpush.msra.mxu0 0.0
    %800 = vmatpush.msra.mxu0 0.0
    %801 = vmatpush.msra.mxu0 0.0
    %v802 = vand.u32 %v544, 4294901760
    %v803 = vsub.f32 %v544, %v802
    %v804 = vand.u32 %v803, 4294901760
    %805 = vmatpush.msra.mxu0 %v804
    %v806 = vand.u32 %v543, 4294901760
    %v807 = vsub.f32 %v543, %v806
    %v808 = vand.u32 %v807, 4294901760
    %809 = vmatpush.msra.mxu0 %v808
    %v810 = vand.u32 %v542, 4294901760
    %v811 = vsub.f32 %v542, %v810
    %v812 = vand.u32 %v811, 4294901760
    %813 = vmatpush.msra.mxu0 %v812
    %v814 = vand.u32 %v541, 4294901760
    %v815 = vsub.f32 %v541, %v814
    %v816 = vand.u32 %v815, 4294901760
    %817 = vmatpush.msra.mxu0 %v816
    %v818 = vand.u32 %v540, 4294901760
    %v819 = vsub.f32 %v540, %v818
    %v820 = vand.u32 %v819, 4294901760
    %821 = vmatpush.msra.mxu0 %v820
    %v822 = vand.u32 %v539, 4294901760
    %v823 = vsub.f32 %v539, %v822
    %v824 = vand.u32 %v823, 4294901760
    %825 = vmatpush.msra.mxu0 %v824
    %v826 = vand.u32 %v538, 4294901760
    %v827 = vsub.f32 %v538, %v826
    %v828 = vand.u32 %v827, 4294901760
    %829 = vmatpush.msra.mxu0 %v828
    %v830 = vand.u32 %v537, 4294901760
    %v831 = vsub.f32 %v537, %v830
    %v832 = vand.u32 %v831, 4294901760
    %833 = vmatpush.msra.mxu0 %v832
    %v834 = vand.u32 %v551, 4294901760
    %835 = vmatmul.f32.gmra.mxu0 %v834
    %v836 = vpop.f32.mrf.mxu0
    %v837 = vadd.f32 %v774, %v836
    %v838 = vand.u32 %v554, 4294901760
    %839 = vmatmul.f32.gmra.mxu0 %v838
    %v840 = vpop.f32.mrf.mxu0
    %v841 = vadd.f32 %v780, %v840
    %v842 = vand.u32 %v557, 4294901760
    %843 = vmatmul.f32.gmra.mxu0 %v842
    %v844 = vpop.f32.mrf.mxu0
    %v845 = vadd.f32 %v786, %v844
    %v846 = vand.u32 %v560, 4294901760
    %847 = vmatmul.f32.gmra.mxu0 %v846
    %v848 = vpop.f32.mrf.mxu0
    %v849 = vadd.f32 %v792, %v848
    %850 = vdwg.mxu0
    %851 = vmatpush.msra.mxu0 0.0
    %852 = vmatpush.msra.mxu0 0.0
    %853 = vmatpush.msra.mxu0 0.0
    %854 = vmatpush.msra.mxu0 0.0
    %855 = vmatpush.msra.mxu0 0.0
    %856 = vmatpush.msra.mxu0 0.0
    %857 = vmatpush.msra.mxu0 0.0
    %858 = vmatpush.msra.mxu0 0.0
    %v859 = vand.u32 %v544, 4294901760
    %860 = vmatpush.msra.mxu0 %v859
    %v861 = vand.u32 %v543, 4294901760
    %862 = vmatpush.msra.mxu0 %v861
    %v863 = vand.u32 %v542, 4294901760
    %864 = vmatpush.msra.mxu0 %v863
    %v865 = vand.u32 %v541, 4294901760
    %866 = vmatpush.msra.mxu0 %v865
    %v867 = vand.u32 %v540, 4294901760
    %868 = vmatpush.msra.mxu0 %v867
    %v869 = vand.u32 %v539, 4294901760
    %870 = vmatpush.msra.mxu0 %v869
    %v871 = vand.u32 %v538, 4294901760
    %872 = vmatpush.msra.mxu0 %v871
    %v873 = vand.u32 %v537, 4294901760
    %874 = vmatpush.msra.mxu0 %v873
    %v875 = vand.u32 %v551, 4294901760
    %876 = vmatmul.f32.gmra.mxu0 %v875
    %v877 = vpop.f32.mrf.mxu0
    %v878 = vadd.f32 %v837, %v877
    %v879 = vand.u32 %v554, 4294901760
    %880 = vmatmul.f32.gmra.mxu0 %v879
    %v881 = vpop.f32.mrf.mxu0
    %v882 = vadd.f32 %v841, %v881
    %v883 = vand.u32 %v557, 4294901760
    %884 = vmatmul.f32.gmra.mxu0 %v883
    %v885 = vpop.f32.mrf.mxu0
    %v886 = vadd.f32 %v845, %v885
    %v887 = vand.u32 %v560, 4294901760
    %888 = vmatmul.f32.gmra.mxu0 %v887
    %v889 = vpop.f32.mrf.mxu0
    %v890 = vadd.f32 %v849, %v889
    %891 = vdwg.mxu0
    %v892 = vmul.f32 %v878, 0.5
    %v893 = vmul.f32 %v882, 0.5
    %v894 = vmul.f32 %v886, 0.5
    %v895 = vmul.f32 %v890, 0.5
    %v896 = vmul.f32 %v878, 0.70710677
    %v897 = vmul.f32 %v882, 0.70710677
    %v898 = vmul.f32 %v886, 0.70710677
    %v899 = vmul.f32 %v890, 0.70710677
    %v900 = vmul.f32 %v896, %v896
    %v901 = vmin.f32 16.0, %v900
    %v902 = vmul.f32 %v901, 2.1237322e-06
    %v903 = vadd.f32 %v902, 0.00028619796
    %v904 = vmul.f32 %v901, %v903
    %v905 = vadd.f32 %v904, 0.0036580483
    %v906 = vmul.f32 %v901, %v905
    %v907 = vadd.f32 %v906, 0.05243302
    %v908 = vmul.f32 %v901, %v907
    %v909 = vadd.f32 %v908, 0.18741608
    %v910 = vmul.f32 %v901, %v909
    %v911 = vadd.f32 %v910, 1.1283791
    %v912 = vmul.f32 %v896, %v911
    %v913 = vmul.f32 %v901, 3.8918573e-05
    %v914 = vadd.f32 %v913, 0.001143296
    %v915 = vmul.f32 %v901, %v914
    %v916 = vadd.f32 %v915, 0.014752088
    %v917 = vmul.f32 %v901, %v916
    %v918 = vadd.f32 %v917, 0.112945676
    %v919 = vmul.f32 %v901, %v918
    %v920 = vadd.f32 %v919, 0.4994258
    %v921 = vmul.f32 %v901, %v920
    %v922 = vadd.f32 %v921, 1.0
    %v923 = vrcp.pop %v922
    %v924 = vmul.f32 %v922, %v923
    %v925 = vsub.f32 1.0, %v924
    %v926 = vmul.f32 %v923, %v925
    %v927 = vadd.f32 %v923, %v926
    %vm928 = vweird.f32 %v922
    %vm929 = vweird.f32 %v923
    %vm930 = vmor %vm928, %vm929
    %v931 = vsel %vm930, %v923, %v927
    %v932 = vand.u32 2147483647, %v922
    %vm933 = vcmp.eq.f32.partialorder %v932, 8.507059e+37
    %v934 = vand.u32 %v922, 2147483648
    %v935 = vor.u32 1.1754944e-38, %v934
    %v936 = vsel %vm933, %v935, %v931
    %v937 = vmul.f32 %v912, %v936
    %v938 = vmin.f32 %v937, 1.0
    %v939 = vmax.f32 %v938, -1.0
    %v940 = vmul.f32 %v897, %v897
    %v941 = vmin.f32 16.0, %v940
    %v942 = vmul.f32 %v941, 2.1237322e-06
    %v943 = vadd.f32 %v942, 0.00028619796
    %v944 = vmul.f32 %v941, %v943
    %v945 = vadd.f32 %v944, 0.0036580483
    %v946 = vmul.f32 %v941, %v945
    %v947 = vadd.f32 %v946, 0.05243302
    %v948 = vmul.f32 %v941, %v947
    %v949 = vadd.f32 %v948, 0.18741608
    %v950 = vmul.f32 %v941, %v949
    %v951 = vadd.f32 %v950, 1.1283791
    %v952 = vmul.f32 %v897, %v951
    %v953 = vmul.f32 %v941, 3.8918573e-05
    %v954 = vadd.f32 %v953, 0.001143296
    %v955 = vmul.f32 %v941, %v954
    %v956 = vadd.f32 %v955, 0.014752088
    %v957 = vmul.f32 %v941, %v956
    %v958 = vadd.f32 %v957, 0.112945676
    %v959 = vmul.f32 %v941, %v958
    %v960 = vadd.f32 %v959, 0.4994258
    %v961 = vmul.f32 %v941, %v960
    %v962 = vadd.f32 %v961, 1.0
    %v963 = vrcp.pop %v962
    %v964 = vmul.f32 %v962, %v963
    %v965 = vsub.f32 1.0, %v964
    %v966 = vmul.f32 %v963, %v965
    %v967 = vadd.f32 %v963, %v966
    %vm968 = vweird.f32 %v962
    %vm969 = vweird.f32 %v963
    %vm970 = vmor %vm968, %vm969
    %v971 = vsel %vm970, %v963, %v967
    %v972 = vand.u32 2147483647, %v962
    %vm973 = vcmp.eq.f32.partialorder %v972, 8.507059e+37
    %v974 = vand.u32 %v962, 2147483648
    %v975 = vor.u32 1.1754944e-38, %v974
    %v976 = vsel %vm973, %v975, %v971
    %v977 = vmul.f32 %v952, %v976
    %v978 = vmin.f32 %v977, 1.0
    %v979 = vmax.f32 %v978, -1.0
    %v980 = vmul.f32 %v898, %v898
    %v981 = vmin.f32 16.0, %v980
    %v982 = vmul.f32 %v981, 2.1237322e-06
    %v983 = vadd.f32 %v982, 0.00028619796
    %v984 = vmul.f32 %v981, %v983
    %v985 = vadd.f32 %v984, 0.0036580483
    %v986 = vmul.f32 %v981, %v985
    %v987 = vadd.f32 %v986, 0.05243302
    %v988 = vmul.f32 %v981, %v987
    %v989 = vadd.f32 %v988, 0.18741608
    %v990 = vmul.f32 %v981, %v989
    %v991 = vadd.f32 %v990, 1.1283791
    %v992 = vmul.f32 %v898, %v991
    %v993 = vmul.f32 %v981, 3.8918573e-05
    %v994 = vadd.f32 %v993, 0.001143296
    %v995 = vmul.f32 %v981, %v994
    %v996 = vadd.f32 %v995, 0.014752088
    %v997 = vmul.f32 %v981, %v996
    %v998 = vadd.f32 %v997, 0.112945676
    %v999 = vmul.f32 %v981, %v998
    %v1000 = vadd.f32 %v999, 0.4994258
    %v1001 = vmul.f32 %v981, %v1000
    %v1002 = vadd.f32 %v1001, 1.0
    %v1003 = vrcp.pop %v1002
    %v1004 = vmul.f32 %v1002, %v1003
    %v1005 = vsub.f32 1.0, %v1004
    %v1006 = vmul.f32 %v1003, %v1005
    %v1007 = vadd.f32 %v1003, %v1006
    %vm1008 = vweird.f32 %v1002
    %vm1009 = vweird.f32 %v1003
    %vm1010 = vmor %vm1008, %vm1009
    %v1011 = vsel %vm1010, %v1003, %v1007
    %v1012 = vand.u32 2147483647, %v1002
    %vm1013 = vcmp.eq.f32.partialorder %v1012, 8.507059e+37
    %v1014 = vand.u32 %v1002, 2147483648
    %v1015 = vor.u32 1.1754944e-38, %v1014
    %v1016 = vsel %vm1013, %v1015, %v1011
    %v1017 = vmul.f32 %v992, %v1016
    %v1018 = vmin.f32 %v1017, 1.0
    %v1019 = vmax.f32 %v1018, -1.0
    %v1020 = vmul.f32 %v899, %v899
    %v1021 = vmin.f32 16.0, %v1020
    %v1022 = vmul.f32 %v1021, 2.1237322e-06
    %v1023 = vadd.f32 %v1022, 0.00028619796
    %v1024 = vmul.f32 %v1021, %v1023
    %v1025 = vadd.f32 %v1024, 0.0036580483
    %v1026 = vmul.f32 %v1021, %v1025
    %v1027 = vadd.f32 %v1026, 0.05243302
    %v1028 = vmul.f32 %v1021, %v1027
    %v1029 = vadd.f32 %v1028, 0.18741608
    %v1030 = vmul.f32 %v1021, %v1029
    %v1031 = vadd.f32 %v1030, 1.1283791
    %v1032 = vmul.f32 %v899, %v1031
    %v1033 = vmul.f32 %v1021, 3.8918573e-05
    %v1034 = vadd.f32 %v1033, 0.001143296
    %v1035 = vmul.f32 %v1021, %v1034
    %v1036 = vadd.f32 %v1035, 0.014752088
    %v1037 = vmul.f32 %v1021, %v1036
    %v1038 = vadd.f32 %v1037, 0.112945676
    %v1039 = vmul.f32 %v1021, %v1038
    %v1040 = vadd.f32 %v1039, 0.4994258
    %v1041 = vmul.f32 %v1021, %v1040
    %v1042 = vadd.f32 %v1041, 1.0
    %v1043 = vrcp.pop %v1042
    %v1044 = vmul.f32 %v1042, %v1043
    %v1045 = vsub.f32 1.0, %v1044
    %v1046 = vmul.f32 %v1043, %v1045
    %v1047 = vadd.f32 %v1043, %v1046
    %vm1048 = vweird.f32 %v1042
    %vm1049 = vweird.f32 %v1043
    %vm1050 = vmor %vm1048, %vm1049
    %v1051 = vsel %vm1050, %v1043, %v1047
    %v1052 = vand.u32 2147483647, %v1042
    %vm1053 = vcmp.eq.f32.partialorder %v1052, 8.507059e+37
    %v1054 = vand.u32 %v1042, 2147483648
    %v1055 = vor.u32 1.1754944e-38, %v1054
    %v1056 = vsel %vm1053, %v1055, %v1051
    %v1057 = vmul.f32 %v1032, %v1056
    %v1058 = vmin.f32 %v1057, 1.0
    %v1059 = vmax.f32 %v1058, -1.0
    %v1060 = vadd.f32 %v939, 1.0
    %v1061 = vadd.f32 %v979, 1.0
    %v1062 = vadd.f32 %v1019, 1.0
    %v1063 = vadd.f32 %v1059, 1.0
    %v1064 = vmul.f32 %v892, %v1060
    %v1065 = vmul.f32 %v893, %v1061
    %v1066 = vmul.f32 %v894, %v1062
    %v1067 = vmul.f32 %v895, %v1063
    %v1068 = vld [vmem:[#allocation5] sm:$0xff]
    %v1069 = vld [vmem:[#allocation5 + $0x8] sm:$0xff]
    %v1070 = vld [vmem:[#allocation5 + $0x10] sm:$0xff]
    %v1071 = vld [vmem:[#allocation5 + $0x18] sm:$0xff]
    %v1073 = vsel %vm70, %v1064, 0
    %v1076 = vsel %vm70, %v1065, 0
    %1078 = vmatpush.msra.mxu0 0.0
    %1079 = vmatpush.msra.mxu0 0.0
    %1080 = vmatpush.msra.mxu0 0.0
    %1081 = vmatpush.msra.mxu0 0.0
    %1082 = vmatpush.msra.mxu0 0.0
    %1083 = vmatpush.msra.mxu0 0.0
    %1084 = vmatpush.msra.mxu0 0.0
    %1085 = vmatpush.msra.mxu0 0.0
    %1086 = vmatpush.msra.mxu0 0.0
    %1087 = vmatpush.msra.mxu0 0.0
    %1088 = vmatpush.msra.mxu0 0.0
    %1089 = vmatpush.msra.mxu0 0.0
    %v1090 = vand.u32 %v1071, 4294901760
    %1091 = vmatpush.msra.mxu0 %v1090
    %v1092 = vand.u32 %v1070, 4294901760
    %1093 = vmatpush.msra.mxu0 %v1092
    %v1094 = vand.u32 %v1069, 4294901760
    %1095 = vmatpush.msra.mxu0 %v1094
    %v1096 = vand.u32 %v1068, 4294901760
    %1097 = vmatpush.msra.mxu0 %v1096
    %v1098 = vand.u32 %v1073, 4294901760
    %v1099 = vsub.f32 %v1073, %v1098
    %v1100 = vand.u32 %v1099, 4294901760
    %v1101 = vsub.f32 %v1099, %v1100
    %v1102 = vand.u32 %v1101, 4294901760
    %1103 = vmatmul.f32.gmra.mxu0 %v1102
    %v1104 = vpop.f32.mrf.mxu0
    %v1105 = vadd.f32 0.0, %v1104
    %v1106 = vand.u32 %v1076, 4294901760
    %v1107 = vsub.f32 %v1076, %v1106
    %v1108 = vand.u32 %v1107, 4294901760
    %v1109 = vsub.f32 %v1107, %v1108
    %v1110 = vand.u32 %v1109, 4294901760
    %1111 = vmatmul.f32.gmra.mxu0 %v1110
    %v1112 = vpop.f32.mrf.mxu0
    %v1113 = vadd.f32 0.0, %v1112
    %1114 = vdwg.mxu0
    %1115 = vmatpush.msra.mxu0 0.0
    %1116 = vmatpush.msra.mxu0 0.0
    %1117 = vmatpush.msra.mxu0 0.0
    %1118 = vmatpush.msra.mxu0 0.0
    %1119 = vmatpush.msra.mxu0 0.0
    %1120 = vmatpush.msra.mxu0 0.0
    %1121 = vmatpush.msra.mxu0 0.0
    %1122 = vmatpush.msra.mxu0 0.0
    %1123 = vmatpush.msra.mxu0 0.0
    %1124 = vmatpush.msra.mxu0 0.0
    %1125 = vmatpush.msra.mxu0 0.0
    %1126 = vmatpush.msra.mxu0 0.0
    %v1127 = vand.u32 %v1071, 4294901760
    %v1128 = vsub.f32 %v1071, %v1127
    %v1129 = vand.u32 %v1128, 4294901760
    %v1130 = vsub.f32 %v1128, %v1129
    %v1131 = vand.u32 %v1130, 4294901760
    %1132 = vmatpush.msra.mxu0 %v1131
    %v1133 = vand.u32 %v1070, 4294901760
    %v1134 = vsub.f32 %v1070, %v1133
    %v1135 = vand.u32 %v1134, 4294901760
    %v1136 = vsub.f32 %v1134, %v1135
    %v1137 = vand.u32 %v1136, 4294901760
    %1138 = vmatpush.msra.mxu0 %v1137
    %v1139 = vand.u32 %v1069, 4294901760
    %v1140 = vsub.f32 %v1069, %v1139
    %v1141 = vand.u32 %v1140, 4294901760
    %v1142 = vsub.f32 %v1140, %v1141
    %v1143 = vand.u32 %v1142, 4294901760
    %1144 = vmatpush.msra.mxu0 %v1143
    %v1145 = vand.u32 %v1068, 4294901760
    %v1146 = vsub.f32 %v1068, %v1145
    %v1147 = vand.u32 %v1146, 4294901760
    %v1148 = vsub.f32 %v1146, %v1147
    %v1149 = vand.u32 %v1148, 4294901760
    %1150 = vmatpush.msra.mxu0 %v1149
    %v1151 = vand.u32 %v1073, 4294901760
    %1152 = vmatmul.f32.gmra.mxu0 %v1151
    %v1153 = vpop.f32.mrf.mxu0
    %v1154 = vadd.f32 %v1105, %v1153
    %v1155 = vand.u32 %v1076, 4294901760
    %1156 = vmatmul.f32.gmra.mxu0 %v1155
    %v1157 = vpop.f32.mrf.mxu0
    %v1158 = vadd.f32 %v1113, %v1157
    %1159 = vdwg.mxu0
    %1160 = vmatpush.msra.mxu0 0.0
    %1161 = vmatpush.msra.mxu0 0.0
    %1162 = vmatpush.msra.mxu0 0.0
    %1163 = vmatpush.msra.mxu0 0.0
    %1164 = vmatpush.msra.mxu0 0.0
    %1165 = vmatpush.msra.mxu0 0.0
    %1166 = vmatpush.msra.mxu0 0.0
    %1167 = vmatpush.msra.mxu0 0.0
    %1168 = vmatpush.msra.mxu0 0.0
    %1169 = vmatpush.msra.mxu0 0.0
    %1170 = vmatpush.msra.mxu0 0.0
    %1171 = vmatpush.msra.mxu0 0.0
    %v1172 = vand.u32 %v1071, 4294901760
    %v1173 = vsub.f32 %v1071, %v1172
    %1174 = vmatpush.msra.mxu0 %v1173
    %v1175 = vand.u32 %v1070, 4294901760
    %v1176 = vsub.f32 %v1070, %v1175
    %1177 = vmatpush.msra.mxu0 %v1176
    %v1178 = vand.u32 %v1069, 4294901760
    %v1179 = vsub.f32 %v1069, %v1178
    %1180 = vmatpush.msra.mxu0 %v1179
    %v1181 = vand.u32 %v1068, 4294901760
    %v1182 = vsub.f32 %v1068, %v1181
    %1183 = vmatpush.msra.mxu0 %v1182
    %v1184 = vand.u32 %v1073, 4294901760
    %v1185 = vsub.f32 %v1073, %v1184
    %1186 = vmatmul.f32.gmra.mxu0 %v1185
    %v1187 = vpop.f32.mrf.mxu0
    %v1188 = vadd.f32 %v1154, %v1187
    %v1189 = vand.u32 %v1076, 4294901760
    %v1190 = vsub.f32 %v1076, %v1189
    %1191 = vmatmul.f32.gmra.mxu0 %v1190
    %v1192 = vpop.f32.mrf.mxu0
    %v1193 = vadd.f32 %v1158, %v1192
    %1194 = vdwg.mxu0
    %1195 = vmatpush.msra.mxu0 0.0
    %1196 = vmatpush.msra.mxu0 0.0
    %1197 = vmatpush.msra.mxu0 0.0
    %1198 = vmatpush.msra.mxu0 0.0
    %1199 = vmatpush.msra.mxu0 0.0
    %1200 = vmatpush.msra.mxu0 0.0
    %1201 = vmatpush.msra.mxu0 0.0
    %1202 = vmatpush.msra.mxu0 0.0
    %1203 = vmatpush.msra.mxu0 0.0
    %1204 = vmatpush.msra.mxu0 0.0
    %1205 = vmatpush.msra.mxu0 0.0
    %1206 = vmatpush.msra.mxu0 0.0
    %v1207 = vand.u32 %v1071, 4294901760
    %1208 = vmatpush.msra.mxu0 %v1207
    %v1209 = vand.u32 %v1070, 4294901760
    %1210 = vmatpush.msra.mxu0 %v1209
    %v1211 = vand.u32 %v1069, 4294901760
    %1212 = vmatpush.msra.mxu0 %v1211
    %v1213 = vand.u32 %v1068, 4294901760
    %1214 = vmatpush.msra.mxu0 %v1213
    %v1215 = vand.u32 %v1073, 4294901760
    %v1216 = vsub.f32 %v1073, %v1215
    %v1217 = vand.u32 %v1216, 4294901760
    %1218 = vmatmul.f32.gmra.mxu0 %v1217
    %v1219 = vpop.f32.mrf.mxu0
    %v1220 = vadd.f32 %v1188, %v1219
    %v1221 = vand.u32 %v1076, 4294901760
    %v1222 = vsub.f32 %v1076, %v1221
    %v1223 = vand.u32 %v1222, 4294901760
    %1224 = vmatmul.f32.gmra.mxu0 %v1223
    %v1225 = vpop.f32.mrf.mxu0
    %v1226 = vadd.f32 %v1193, %v1225
    %1227 = vdwg.mxu0
    %1228 = vmatpush.msra.mxu0 0.0
    %1229 = vmatpush.msra.mxu0 0.0
    %1230 = vmatpush.msra.mxu0 0.0
    %1231 = vmatpush.msra.mxu0 0.0
    %1232 = vmatpush.msra.mxu0 0.0
    %1233 = vmatpush.msra.mxu0 0.0
    %1234 = vmatpush.msra.mxu0 0.0
    %1235 = vmatpush.msra.mxu0 0.0
    %1236 = vmatpush.msra.mxu0 0.0
    %1237 = vmatpush.msra.mxu0 0.0
    %1238 = vmatpush.msra.mxu0 0.0
    %1239 = vmatpush.msra.mxu0 0.0
    %v1240 = vand.u32 %v1071, 4294901760
    %v1241 = vsub.f32 %v1071, %v1240
    %v1242 = vand.u32 %v1241, 4294901760
    %1243 = vmatpush.msra.mxu0 %v1242
    %v1244 = vand.u32 %v1070, 4294901760
    %v1245 = vsub.f32 %v1070, %v1244
    %v1246 = vand.u32 %v1245, 4294901760
    %1247 = vmatpush.msra.mxu0 %v1246
    %v1248 = vand.u32 %v1069, 4294901760
    %v1249 = vsub.f32 %v1069, %v1248
    %v1250 = vand.u32 %v1249, 4294901760
    %1251 = vmatpush.msra.mxu0 %v1250
    %v1252 = vand.u32 %v1068, 4294901760
    %v1253 = vsub.f32 %v1068, %v1252
    %v1254 = vand.u32 %v1253, 4294901760
    %1255 = vmatpush.msra.mxu0 %v1254
    %v1256 = vand.u32 %v1073, 4294901760
    %1257 = vmatmul.f32.gmra.mxu0 %v1256
    %v1258 = vpop.f32.mrf.mxu0
    %v1259 = vadd.f32 %v1220, %v1258
    %v1260 = vand.u32 %v1076, 4294901760
    %1261 = vmatmul.f32.gmra.mxu0 %v1260
    %v1262 = vpop.f32.mrf.mxu0
    %v1263 = vadd.f32 %v1226, %v1262
    %1264 = vdwg.mxu0
    %1265 = vmatpush.msra.mxu0 0.0
    %1266 = vmatpush.msra.mxu0 0.0
    %1267 = vmatpush.msra.mxu0 0.0
    %1268 = vmatpush.msra.mxu0 0.0
    %1269 = vmatpush.msra.mxu0 0.0
    %1270 = vmatpush.msra.mxu0 0.0
    %1271 = vmatpush.msra.mxu0 0.0
    %1272 = vmatpush.msra.mxu0 0.0
    %1273 = vmatpush.msra.mxu0 0.0
    %1274 = vmatpush.msra.mxu0 0.0
    %1275 = vmatpush.msra.mxu0 0.0
    %1276 = vmatpush.msra.mxu0 0.0
    %v1277 = vand.u32 %v1071, 4294901760
    %1278 = vmatpush.msra.mxu0 %v1277
    %v1279 = vand.u32 %v1070, 4294901760
    %1280 = vmatpush.msra.mxu0 %v1279
    %v1281 = vand.u32 %v1069, 4294901760
    %1282 = vmatpush.msra.mxu0 %v1281
    %v1283 = vand.u32 %v1068, 4294901760
    %1284 = vmatpush.msra.mxu0 %v1283
    %v1285 = vand.u32 %v1073, 4294901760
    %1286 = vmatmul.f32.gmra.mxu0 %v1285
    %v1287 = vpop.f32.mrf.mxu0
    %v1288 = vadd.f32 %v1259, %v1287
    %v1289 = vand.u32 %v1076, 4294901760
    %1290 = vmatmul.f32.gmra.mxu0 %v1289
    %v1291 = vpop.f32.mrf.mxu0
    %v1292 = vadd.f32 %v1263, %v1291
    %1293 = vdwg.mxu0
    %v1294 = vmul.f32 %v1288, %v1066
    %v1295 = vmul.f32 %v1292, %v1067
    %v1296 = vsel %vm70, %v1294, 0.0
    %1297 = vadd.xlane.f32.xlu0 %v1296
    %v1298 = vpop.xlane.xlu0 %1297
    %v1299 = vsel %vm70, %v1295, 0.0
    %1300 = vadd.xlane.f32.xlu0 %v1299
    %v1301 = vpop.xlane.xlu0 %1300
    %v1304 = vlaneseq
    %v1305 = vand.u32 %v1304, 127
    %v1306 = vperm.slane %v1298, %v1305
    %v1307 = vadd.s32 %v1305, 4294967288
    %v1308 = vperm.slane %v1301, %v1307
    %vm1309 = vcmask 130112
    %v1310 = vsel %vm1309, %v1308, %v1306
    %vm1312 = vcmask 122880
    %1313 = vst.msk [vmem:[#allocation7] sm:$0x1] %vm1312, %v1310
    %1314 = vst.msk [vmem:[%s7] sm:$0xff] %vm70, %v1064
    %1315 = vst.msk [vmem:[%s7 + $0x8] sm:$0xff] %vm70, %v1065
    %1316 = vst.msk [vmem:[%s7 + $0x10] sm:$0xff] %vm70, %v1066
    %1317 = vst.msk [vmem:[%s7 + $0x18] sm:$0xff] %vm70, %v1067
    // Predicated region
    $region34: #{forward.1} parent=1 // pred_check
      _
    $region35: #{forward.1} parent=1 // pred_check_branch
      %1319 = sbr.rel (0) target = $region37
    $region36: #{forward.1} parent=1 // pred_region
      %1321 = vsyncadd [#allocation4], 0
      %s1323 = sshll.u32 [#allocation7], 4
      %s1324 = int_to_ptr.vmem [resolvable:$true] %s1323
      %s1325 = sshll.u32 %s6, 4
      %s1326 = int_to_ptr.hbm [resolvable:$true] %s1325
      %1328 = dma.vmem_to_hbm [thread:$0]  %s1324, 16, %s1326, [#allocation4]
    $region37: #{forward.1} parent=1 // pred_fallthru
      _
    // Predicated region
    $region38: #{forward.1} parent=1 // pred_check
      _
    $region39: #{forward.1} parent=1 // pred_check_branch
      %1330 = sbr.rel (0) target = $region41
    $region40: #{forward.1} parent=1 // pred_region
      _
    $region41: #{forward.1} parent=1 // pred_fallthru
      _
    // Predicated region
    $region42: #{forward.1} parent=1 // pred_check
      _
    $region43: #{forward.1} parent=1 // pred_check_branch
      %1332 = sbr.rel (0) target = $region45
    $region44: #{forward.1} parent=1 // pred_region
      %1334 = dma.done [#allocation4], 16
    $region45: #{forward.1} parent=1 // pred_fallthru
      _
    // Predicated region
    $region46: #{forward.1} parent=1 // pred_check
      _
    $region47: #{forward.1} parent=1 // pred_check_branch
      %1336 = sbr.rel (0) target = $region49
    $region48: #{forward.1} parent=1 // pred_region
      _
    $region49: #{forward.1} parent=1 // pred_fallthru
      _
    %1337 = vsyncpa [#allocation3], 1
    %1338 = vsyncpa [#allocation6], 1
    %1339 = vsyncpa [#allocation4], 1

</llo_original>
